<compile_context>
chip_gen: v5e
topology: v5e:2x2
jax: 0.10.0
libtpu: 0.0.40
codegen_flags: <defaults>
</compile_context>

<pallas_src>
import functools

import jax
import jax.numpy as jnp
from jax import lax
from jax.experimental import pallas as pl
from jax.experimental.pallas import tpu as pltpu


def _round_up(n: int, m: int) -> int:
    return ((n + m - 1) // m) * m


def _fused_mlp_kernel(x_ref, w0_ref, b0_ref, wh_ref, bh_ref, wo_ref, bo_ref,
                      o_ref, *, n_rest: int):
    """Whole MLP for one batch tile: ReLU(x@W0+b0) -> n_rest hidden layers -> head.

    Weights are bf16 (MXU-native); accumulation and all elementwise work are f32.
    Intermediates live in vregs; the only HBM write is the lane-dense o_ref store.
    """
    # First hidden layer: (tB, Din)bf16 @ (Din, Hp)bf16 -> f32, +bias, ReLU.
    x = x_ref[...].astype(jnp.bfloat16)
    h = jnp.dot(x, w0_ref[...], preferred_element_type=jnp.float32)
    h = jnp.maximum(h + b0_ref[...], 0.0)

    # Remaining hidden layers over the stacked (L-1, Hp, Hp) weights.
    # TODO(synk): dropout with p>0 (training mode) not implemented; the module
    # default p=0 is the identity, so eval-mode semantics are exact.
    def layer(i, h):
        hi = jnp.dot(h.astype(jnp.bfloat16), wh_ref[i],
                     preferred_element_type=jnp.float32)
        return jnp.maximum(hi + bh_ref[i], 0.0)

    if n_rest > 0:
        h = lax.fori_loop(0, n_rest, layer, h, unroll=True)

    # Head (no activation). wo/bo are zero-padded to 128 lanes -> lane-dense store.
    y = jnp.dot(h.astype(jnp.bfloat16), wo_ref[...],
                preferred_element_type=jnp.float32)
    o_ref[...] = (y + bo_ref[...]).astype(o_ref.dtype)


def pack_params_for_kernel(layer_params, head_params, lane=128):
    """One-time packing: pad hidden/head dims to 128 lanes, stack hidden layers,
    cast matmul operands to bf16 (biases stay f32 for the VPU adds)."""
    assert len(layer_params) >= 2, "expects >=2 hidden layers (n_layers=4 in module)"
    w0, b0 = layer_params[0]                       # (Din, H), (1, H)
    H = w0.shape[1]
    Hp = _round_up(H, lane)
    pad_h = Hp - H

    w0p = jnp.pad(w0, ((0, 0), (0, pad_h))).astype(jnp.bfloat16)          # (Din, Hp)
    b0p = jnp.pad(b0, ((0, 0), (0, pad_h)))                               # (1, Hp) f32

    wh = jnp.stack([jnp.pad(w, ((0, pad_h), (0, pad_h)))
                    for (w, _) in layer_params[1:]]).astype(jnp.bfloat16)  # (L-1,Hp,Hp)
    bh = jnp.stack([jnp.pad(b, ((0, 0), (0, pad_h)))
                    for (_, b) in layer_params[1:]])                       # (L-1,1,Hp) f32

    head_w, head_b = head_params                                           # (H, C), (1, C)
    n_classes = head_w.shape[1]
    Cp = _round_up(n_classes, lane)
    wo = jnp.pad(head_w, ((0, pad_h), (0, Cp - n_classes))).astype(jnp.bfloat16)  # (Hp, Cp)
    bo = jnp.pad(head_b, ((0, 0), (0, Cp - n_classes)))                    # (1, Cp) f32

    return dict(w0=w0p, b0=b0p, wh=wh, bh=bh, wo=wo, bo=bo,
                n_classes=n_classes, d_pad=Cp, h_pad=Hp)


def _pick_batch_tile(B: int) -> int:
    """Batch tile: sublane-aligned, capped at 256 rows (one full MXU pass on
    v6e/v7x, two on v5e); prefer >=2 blocks so the v7x megacore gets both TCs."""
    if B <= 8:
        return B
    for t in (256, 128, 64, 32, 16, 8):
        if B % t == 0 and B // t >= 2:
            return t
    return B


def fully_connected_forward(x, packed, *, batch_tile=None, return_padded=False):
    """Equivalent of FullyConnected.forward (eval mode, dropout p=0).

    With return_padded=True the lane-dense (B, 128) logits are returned as-is
    (valid columns are [:n_classes]) so downstream ops can consume them without
    the wrapper-side slice's extra HBM round-trip.
    """
    B, Din = x.shape
    w0, b0 = packed["w0"], packed["b0"]
    wh, bh = packed["wh"], packed["bh"]
    wo, bo = packed["wo"], packed["bo"]
    Hp = packed["h_pad"]
    Cp = packed["d_pad"]
    n_rest = wh.shape[0]

    tile_B = batch_tile if batch_tile is not None else _pick_batch_tile(B)
    grid = (pl.cdiv(B, tile_B),)

    kernel = functools.partial(_fused_mlp_kernel, n_rest=n_rest)

    # Advisory cost hint for XLA's scheduler around the custom call.
    flops = 2 * B * (Din * Hp + n_rest * Hp * Hp + Hp * Cp)
    bytes_accessed = (4 * x.size + 2 * (w0.size + wh.size + wo.size)
                      + 4 * (b0.size + bh.size + bo.size) + 4 * B * Cp)
    cost = pl.CostEstimate(flops=flops, transcendentals=0,
                           bytes_accessed=bytes_accessed)

    out_padded = pl.pallas_call(
        kernel,
        out_shape=jax.ShapeDtypeStruct((B, Cp), jnp.float32),
        grid_spec=pltpu.PrefetchScalarGridSpec(
            num_scalar_prefetch=0,
            grid=grid,
            in_specs=[
                pl.BlockSpec((tile_B, Din), lambda i: (i, 0)),   # x: tiled over batch
                pl.BlockSpec(w0.shape, lambda i: (0, 0)),        # W0      (VMEM-resident)
                pl.BlockSpec(b0.shape, lambda i: (0, 0)),        # b0
                pl.BlockSpec(wh.shape, lambda i: (0, 0, 0)),     # W1..L-1 stacked
                pl.BlockSpec(bh.shape, lambda i: (0, 0, 0)),     # b1..L-1 stacked
                pl.BlockSpec(wo.shape, lambda i: (0, 0)),        # head W (lane-padded)
                pl.BlockSpec(bo.shape, lambda i: (0, 0)),        # head b (lane-padded)
            ],
            out_specs=pl.BlockSpec((tile_B, Cp), lambda i: (i, 0)),  # lane-dense store
        ),
        compiler_params=pltpu.CompilerParams(
            dimension_semantics=("parallel",)),                  # megacore on v7x
        cost_estimate=cost,
    )(x, w0, b0, wh, bh, wo, bo)

    if return_padded:
        return out_padded
    # Small-batch convenience path; for large B prefer return_padded=True (the
    # slice is a separate XLA op that round-trips the whole output through HBM).
    return out_padded[:, : packed["n_classes"]]


def init_fully_connected_params(key, input_dim, hidden_dim, n_layers, n_classes=10):
    """Deterministic init mirroring torch.nn.Linear default U(-1/sqrt(fan_in), +).

    Weights are (in, out) -- the transpose of PyTorch's (out, in) -- and biases
    are pre-shaped (1, out) so the kernel computes y = x @ W + b directly.
    """
    params = []
    dims_in = [input_dim] + [hidden_dim] * (n_layers - 1)
    for i in range(n_layers):
        key, kw, kb = jax.random.split(key, 3)
        fan_in = dims_in[i]
        bound = 1.0 / jnp.sqrt(fan_in)
        w = jax.random.uniform(kw, (fan_in, hidden_dim), jnp.float32, -bound, bound)
        b = jax.random.uniform(kb, (1, hidden_dim), jnp.float32, -bound, bound)
        params.append((w, b))
    key, kw, kb = jax.random.split(key, 3)
    bound = 1.0 / jnp.sqrt(hidden_dim)
    head_w = jax.random.uniform(kw, (hidden_dim, n_classes), jnp.float32, -bound, bound)
    head_b = jax.random.uniform(kb, (1, n_classes), jnp.float32, -bound, bound)
    return params, (head_w, head_b)


if __name__ == "__main__":
    # Small shapes consistent with the module's forward (flattened features in).
    batch = 64         # splits into 2 x 32-row blocks -> exercises the batch grid
    input_dim = 32
    hidden_dim = 64
    n_layers = 4
    n_classes = 10

    key = jax.random.PRNGKey(0)
    key, kx = jax.random.split(key)
    x = jax.random.normal(kx, (batch, input_dim), jnp.float32)

    layer_params, head_params = init_fully_connected_params(
        key, input_dim, hidden_dim, n_layers, n_classes
    )
    packed = pack_params_for_kernel(layer_params, head_params)

    out = fully_connected_forward(x, packed)
    out = jax.block_until_ready(out)

    # Sanity check against a plain-JAX f32 reference of the module forward.
    # Tolerance is loosened because the kernel feeds bf16 operands to the MXU
    # (accumulation stays f32).
    ref = x
    for (w, b) in layer_params:
        ref = jnp.maximum(ref @ w + b, 0.0)
    ref = ref @ head_params[0] + head_params[1]
    assert out.shape == (batch, n_classes)
    assert jnp.allclose(out, ref, atol=5e-2, rtol=5e-2)

    print("KERNEL_OK")
</pallas_src>

<mosaic_0001>
module attributes {stable_mosaic.version = 11 : i64} {
  func.func @_fused_mlp_kernel(%arg0: i32, %arg1: memref<32x32xf32, #tpu.memory_space<vmem>>, %arg2: memref<32x128xbf16, #tpu.memory_space<vmem>>, %arg3: memref<1x128xf32, #tpu.memory_space<vmem>>, %arg4: memref<3x128x128xbf16, #tpu.memory_space<vmem>>, %arg5: memref<3x1x128xf32, #tpu.memory_space<vmem>>, %arg6: memref<128x128xbf16, #tpu.memory_space<vmem>>, %arg7: memref<1x128xf32, #tpu.memory_space<vmem>>, %arg8: memref<32x128xf32, #tpu.memory_space<vmem>>) attributes {dimension_semantics = [#tpu.dimension_semantics<parallel>], iteration_bounds = array<i64: 2>, scalar_prefetch = 0 : i64, scratch_operands = 0 : i64, tpu.core_type = #tpu.core_type<tc>, window_params = [{transform_indices = @transform_0, window_bounds = array<i64: 32, 32>}, {pipeline_mode = #tpu.pipeline_mode<synchronous>, transform_indices = @transform_1, window_bounds = array<i64: 32, 128>}, {pipeline_mode = #tpu.pipeline_mode<synchronous>, transform_indices = @transform_2, window_bounds = array<i64: 1, 128>}, {pipeline_mode = #tpu.pipeline_mode<synchronous>, transform_indices = @transform_3, window_bounds = array<i64: 3, 128, 128>}, {pipeline_mode = #tpu.pipeline_mode<synchronous>, transform_indices = @transform_4, window_bounds = array<i64: 3, 1, 128>}, {pipeline_mode = #tpu.pipeline_mode<synchronous>, transform_indices = @transform_5, window_bounds = array<i64: 128, 128>}, {pipeline_mode = #tpu.pipeline_mode<synchronous>, transform_indices = @transform_6, window_bounds = array<i64: 1, 128>}, {transform_indices = @transform_7, window_bounds = array<i64: 32, 128>}]} {
    %c0 = arith.constant 0 : index
    %c0_0 = arith.constant 0 : index
    %0 = vector.load %arg1[%c0, %c0_0] : memref<32x32xf32, #tpu.memory_space<vmem>>, vector<32x32xf32>
    %1 = arith.truncf %0 : vector<32x32xf32> to vector<32x32xbf16>
    %c0_1 = arith.constant 0 : index
    %c0_2 = arith.constant 0 : index
    %2 = vector.load %arg2[%c0_1, %c0_2] : memref<32x128xbf16, #tpu.memory_space<vmem>>, vector<32x128xbf16>
    %cst = arith.constant dense<0.000000e+00> : vector<32x128xf32>
    %3 = tpu.matmul %1, %2, %cst {dimension_numbers = #tpu.dot_dimension_numbers<[1], [0], [0], [1], [0, 0, 1, 1], [], []>} : vector<32x32xbf16>, vector<32x128xbf16>, vector<32x128xf32> -> vector<32x128xf32>
    %c0_3 = arith.constant 0 : index
    %c0_4 = arith.constant 0 : index
    %4 = vector.load %arg3[%c0_3, %c0_4] : memref<1x128xf32, #tpu.memory_space<vmem>>, vector<1x128xf32>
    %5 = vector.broadcast %4 : vector<1x128xf32> to vector<32x128xf32>
    %6 = arith.addf %3, %5 : vector<32x128xf32>
    %cst_5 = arith.constant 0.000000e+00 : f32
    %7 = vector.broadcast %cst_5 : f32 to vector<32x128xf32>
    %8 = arith.maximumf %6, %7 : vector<32x128xf32>
    %c0_i32 = arith.constant 0 : i32
    %9 = arith.truncf %8 : vector<32x128xf32> to vector<32x128xbf16>
    %10 = arith.index_cast %c0_i32 : i32 to index
    %c0_6 = arith.constant 0 : index
    %c0_7 = arith.constant 0 : index
    %11 = vector.load %arg4[%10, %c0_6, %c0_7] : memref<3x128x128xbf16, #tpu.memory_space<vmem>>, vector<1x128x128xbf16>
    %12 = vector.shape_cast %11 : vector<1x128x128xbf16> to vector<128x128xbf16>
    %cst_8 = arith.constant dense<0.000000e+00> : vector<32x128xf32>
    %13 = tpu.matmul %9, %12, %cst_8 {dimension_numbers = #tpu.dot_dimension_numbers<[1], [0], [0], [1], [0, 0, 1, 1], [], []>} : vector<32x128xbf16>, vector<128x128xbf16>, vector<32x128xf32> -> vector<32x128xf32>
    %14 = arith.index_cast %c0_i32 : i32 to index
    %c0_9 = arith.constant 0 : index
    %c0_10 = arith.constant 0 : index
    %15 = vector.load %arg5[%14, %c0_9, %c0_10] : memref<3x1x128xf32, #tpu.memory_space<vmem>>, vector<1x1x128xf32>
    %16 = vector.shape_cast %15 : vector<1x1x128xf32> to vector<1x128xf32>
    %17 = vector.broadcast %16 : vector<1x128xf32> to vector<32x128xf32>
    %18 = arith.addf %13, %17 : vector<32x128xf32>
    %cst_11 = arith.constant 0.000000e+00 : f32
    %19 = vector.broadcast %cst_11 : f32 to vector<32x128xf32>
    %20 = arith.maximumf %18, %19 : vector<32x128xf32>
    %c1_i32 = arith.constant 1 : i32
    %21 = arith.truncf %20 : vector<32x128xf32> to vector<32x128xbf16>
    %22 = arith.index_cast %c1_i32 : i32 to index
    %c0_12 = arith.constant 0 : index
    %c0_13 = arith.constant 0 : index
    %23 = vector.load %arg4[%22, %c0_12, %c0_13] : memref<3x128x128xbf16, #tpu.memory_space<vmem>>, vector<1x128x128xbf16>
    %24 = vector.shape_cast %23 : vector<1x128x128xbf16> to vector<128x128xbf16>
    %cst_14 = arith.constant dense<0.000000e+00> : vector<32x128xf32>
    %25 = tpu.matmul %21, %24, %cst_14 {dimension_numbers = #tpu.dot_dimension_numbers<[1], [0], [0], [1], [0, 0, 1, 1], [], []>} : vector<32x128xbf16>, vector<128x128xbf16>, vector<32x128xf32> -> vector<32x128xf32>
    %26 = arith.index_cast %c1_i32 : i32 to index
    %c0_15 = arith.constant 0 : index
    %c0_16 = arith.constant 0 : index
    %27 = vector.load %arg5[%26, %c0_15, %c0_16] : memref<3x1x128xf32, #tpu.memory_space<vmem>>, vector<1x1x128xf32>
    %28 = vector.shape_cast %27 : vector<1x1x128xf32> to vector<1x128xf32>
    %29 = vector.broadcast %28 : vector<1x128xf32> to vector<32x128xf32>
    %30 = arith.addf %25, %29 : vector<32x128xf32>
    %cst_17 = arith.constant 0.000000e+00 : f32
    %31 = vector.broadcast %cst_17 : f32 to vector<32x128xf32>
    %32 = arith.maximumf %30, %31 : vector<32x128xf32>
    %c2_i32 = arith.constant 2 : i32
    %33 = arith.truncf %32 : vector<32x128xf32> to vector<32x128xbf16>
    %34 = arith.index_cast %c2_i32 : i32 to index
    %c0_18 = arith.constant 0 : index
    %c0_19 = arith.constant 0 : index
    %35 = vector.load %arg4[%34, %c0_18, %c0_19] : memref<3x128x128xbf16, #tpu.memory_space<vmem>>, vector<1x128x128xbf16>
    %36 = vector.shape_cast %35 : vector<1x128x128xbf16> to vector<128x128xbf16>
    %cst_20 = arith.constant dense<0.000000e+00> : vector<32x128xf32>
    %37 = tpu.matmul %33, %36, %cst_20 {dimension_numbers = #tpu.dot_dimension_numbers<[1], [0], [0], [1], [0, 0, 1, 1], [], []>} : vector<32x128xbf16>, vector<128x128xbf16>, vector<32x128xf32> -> vector<32x128xf32>
    %38 = arith.index_cast %c2_i32 : i32 to index
    %c0_21 = arith.constant 0 : index
    %c0_22 = arith.constant 0 : index
    %39 = vector.load %arg5[%38, %c0_21, %c0_22] : memref<3x1x128xf32, #tpu.memory_space<vmem>>, vector<1x1x128xf32>
    %40 = vector.shape_cast %39 : vector<1x1x128xf32> to vector<1x128xf32>
    %41 = vector.broadcast %40 : vector<1x128xf32> to vector<32x128xf32>
    %42 = arith.addf %37, %41 : vector<32x128xf32>
    %cst_23 = arith.constant 0.000000e+00 : f32
    %43 = vector.broadcast %cst_23 : f32 to vector<32x128xf32>
    %44 = arith.maximumf %42, %43 : vector<32x128xf32>
    %c3_i32 = arith.constant 3 : i32
    %45 = arith.truncf %44 : vector<32x128xf32> to vector<32x128xbf16>
    %c0_24 = arith.constant 0 : index
    %c0_25 = arith.constant 0 : index
    %46 = vector.load %arg6[%c0_24, %c0_25] : memref<128x128xbf16, #tpu.memory_space<vmem>>, vector<128x128xbf16>
    %cst_26 = arith.constant dense<0.000000e+00> : vector<32x128xf32>
    %47 = tpu.matmul %45, %46, %cst_26 {dimension_numbers = #tpu.dot_dimension_numbers<[1], [0], [0], [1], [0, 0, 1, 1], [], []>} : vector<32x128xbf16>, vector<128x128xbf16>, vector<32x128xf32> -> vector<32x128xf32>
    %c0_27 = arith.constant 0 : index
    %c0_28 = arith.constant 0 : index
    %48 = vector.load %arg7[%c0_27, %c0_28] : memref<1x128xf32, #tpu.memory_space<vmem>>, vector<1x128xf32>
    %49 = vector.broadcast %48 : vector<1x128xf32> to vector<32x128xf32>
    %50 = arith.addf %47, %49 : vector<32x128xf32>
    %c0_29 = arith.constant 0 : index
    %c0_30 = arith.constant 0 : index
    %51 = vector.load %arg8[%c0_29, %c0_30] : memref<32x128xf32, #tpu.memory_space<vmem>>, vector<32x128xf32>
    tpu.vector_store %arg8[%c0_29, %c0_30], %50 {strides = array<i32>} : memref<32x128xf32, #tpu.memory_space<vmem>>, vector<32x128xf32>,
    return
  }
  func.func @transform_0(%arg0: i32) -> (i32, i32) {
    %c0_i32 = arith.constant 0 : i32
    %c0_i32_0 = arith.constant 0 : i32
    return %arg0, %c0_i32 : i32, i32
  }
  func.func @transform_1(%arg0: i32) -> (i32, i32) {
    %c0_i32 = arith.constant 0 : i32
    %c0_i32_0 = arith.constant 0 : i32
    %c0_i32_1 = arith.constant 0 : i32
    return %c0_i32, %c0_i32_0 : i32, i32
  }
  func.func @transform_2(%arg0: i32) -> (i32, i32) {
    %c0_i32 = arith.constant 0 : i32
    %c0_i32_0 = arith.constant 0 : i32
    %c0_i32_1 = arith.constant 0 : i32
    return %c0_i32, %c0_i32_0 : i32, i32
  }
  func.func @transform_3(%arg0: i32) -> (i32, i32, i32) {
    %c0_i32 = arith.constant 0 : i32
    %c0_i32_0 = arith.constant 0 : i32
    %c0_i32_1 = arith.constant 0 : i32
    %c0_i32_2 = arith.constant 0 : i32
    return %c0_i32, %c0_i32_0, %c0_i32_1 : i32, i32, i32
  }
  func.func @transform_4(%arg0: i32) -> (i32, i32, i32) {
    %c0_i32 = arith.constant 0 : i32
    %c0_i32_0 = arith.constant 0 : i32
    %c0_i32_1 = arith.constant 0 : i32
    %c0_i32_2 = arith.constant 0 : i32
    return %c0_i32, %c0_i32_0, %c0_i32_1 : i32, i32, i32
  }
  func.func @transform_5(%arg0: i32) -> (i32, i32) {
    %c0_i32 = arith.constant 0 : i32
    %c0_i32_0 = arith.constant 0 : i32
    %c0_i32_1 = arith.constant 0 : i32
    return %c0_i32, %c0_i32_0 : i32, i32
  }
  func.func @transform_6(%arg0: i32) -> (i32, i32) {
    %c0_i32 = arith.constant 0 : i32
    %c0_i32_0 = arith.constant 0 : i32
    %c0_i32_1 = arith.constant 0 : i32
    return %c0_i32, %c0_i32_0 : i32, i32
  }
  func.func @transform_7(%arg0: i32) -> (i32, i32) {
    %c0_i32 = arith.constant 0 : i32
    %c0_i32_0 = arith.constant 0 : i32
    return %arg0, %c0_i32 : i32, i32
  }
}

</mosaic_0001>

<llo_original>
// kernel: tpu_custom_call.1
$region0: #{tpu_custom_call.1}
  #allocation0 [shape = 'u32[]', space=smem, size = 0x4, offset = 0x4, fixed_abs, tag = 'smem constant byte address 0x4 - core index']
  #allocation1 [shape = 'u32[72,128]{1,0:T(1,128)}', space=vmem, size = 0x9000, scoped, tag = 'internal scratch']
  %s0 = inlined_call_operand.vmem [shape: f32[64,32], index: 0, kind: input, shape index: {}]
  %s1 = inlined_call_operand.vmem [shape: bf16[32,128], index: 1, kind: input, shape index: {}]
  %s2 = inlined_call_operand.vmem [shape: f32[1,128], index: 2, kind: input, shape index: {}]
  %s3 = inlined_call_operand.hbm [shape: bf16[3,128,128], index: 3, kind: input, shape index: {}]
  %s4 = inlined_call_operand.vmem [shape: f32[3,1,128], index: 4, kind: input, shape index: {}]
  %s5 = inlined_call_operand.vmem [shape: bf16[128,128], index: 5, kind: input, shape index: {}]
  %s6 = inlined_call_operand.vmem [shape: f32[1,128], index: 6, kind: input, shape index: {}]
  %s7 = inlined_call_operand.hbm [shape: f32[64,128], index: 7, kind: output, shape index: {}]
  %s8 = sld [smem:[#allocation0]]
  $region65: #{tpu_custom_call.1} parent=0
    _
  %s10 = ssub.s32 1, %s8
  %s11 = scalar_select 0, %s10, %s8
  $region1: #{tpu_custom_call.1} parent=0
    #allocation2 [shape = 'u8[98304]{0}', space=vmem, size = 0x18000, scoped, tag = 'input window, operand 3, single buffered']
    #allocation3 [shape = 's32[2]{0}', space=sflag, size = 0x8, scoped, tag = 'scoped memory for tpu_custom_call.1']
    #allocation4 [shape = 's32[2]{0}', space=sflag, size = 0x8, scoped, tag = 'scoped memory for tpu_custom_call.1']
    #allocation5 [shape = 'u8[32768]{0}', space=vmem, size = 0x8000, scoped, tag = 'output window, operand 0']
    %12 = vsyncpa [#allocation3], 0
    %13 = vsyncpa [#allocation4], 0
    %s14 = scalar_lea.sflag [#allocation4], 1
    %15 = vsyncpa %s14, 0
    loop: start=0, step=1, limit=4
    $region2: #{tpu_custom_call.1} parent=1 // loop_pre_header
      _
    $region3: #{tpu_custom_call.1} parent=1 // loop_header
      %s17 = sphi 0, %s21
      %p18 = scmp.ge.s32.totalorder %s17, 4
      %s27 = sphi 0, %s29
      %s30 = sphi 0, %s27
      %s31 = sphi 0, %s30
      %s47 = sphi 0, %s31
      %s51 = sphi 0, %s51
      %s53 = sphi 0, %s51
      %s54 = sphi 0, %s53
      %s68 = sphi 0, %s54
      %s72 = sphi 0, %s72
      %s74 = sphi 0, %s72
      %s75 = sphi 0, %s74
      %s89 = sphi 0, %s75
      %s93 = sphi 0, %s93
      %s95 = sphi 0, %s93
      %s96 = sphi 0, %s95
      %s110 = sphi 0, %s96
      %s114 = sphi 0, %s114
      %s116 = sphi 0, %s114
      %s117 = sphi 0, %s116
      %s131 = sphi 0, %s117
      %s135 = sphi 0, %s135
      %s137 = sphi 0, %s135
      %s138 = sphi 0, %s137
      %s152 = sphi 0, %s138
      %s156 = sphi 0, %s156
      %s158 = sphi 0, %s156
      %s159 = sphi 0, %s158
      %s173 = sphi 0, %s159
      %s179 = sphi 0, %s181
      %s182 = sphi 0, %s179
      %s183 = sphi 0, %s182
      %s199 = sphi 0, %s183
    $region4: #{tpu_custom_call.1} parent=1 // loop_header_branch
      %20 = sbr.rel (%p18) target = $region8
    $region5: #{tpu_custom_call.1} parent=1 // loop_body
      %s22 = ssub.s32 %s17, 1
      %s23 = ssub.s32 %s17, 2
      %s24 = sadd.s32 %s17, 1
      %s25 = ssub.s32 %s17, %s24
      %p26 = scmp.eq.s32.totalorder %s25, 0
      %s28 = sadd.s32 %s27, 1
      %s29 = scalar_select %p26, %s27, %s28
      %p32 = pneg %p26
      %p33 = scmp.eq.s32.totalorder %s17, 1
      %p34 = por %p32, %p33
      %p35 = scmp.ne.s32.totalorder %s27, %s30
      %p36 = scmp.eq.s32.totalorder %s17, 0
      %p37 = por %p35, %p36
      %p38 = scmp.ne.s32.totalorder %s27, %s30
      %p39 = scmp.eq.s32.totalorder %s22, 1
      %p40 = por %p38, %p39
      %p41 = scmp.ne.s32.totalorder %s30, %s31
      %p42 = scmp.eq.s32.totalorder %s22, 0
      %p43 = por %p41, %p42
      %p44 = scmp.ne.s32.totalorder %s30, %s31
      %p45 = scmp.eq.s32.totalorder %s23, 1
      %p46 = por %p44, %p45
      %p48 = scmp.ne.s32.totalorder %s31, %s47
      %p49 = scmp.eq.s32.totalorder %s23, 0
      %p50 = por %p48, %p49
      %s52 = sadd.s32 %s51, 1
      %p55 = scmp.eq.s32.totalorder %s17, 1
      %p56 = scmp.ne.s32.totalorder %s51, %s53
      %p57 = scmp.eq.s32.totalorder %s17, 0
      %p58 = por %p56, %p57
      %p59 = scmp.ne.s32.totalorder %s51, %s53
      %p60 = scmp.eq.s32.totalorder %s22, 1
      %p61 = por %p59, %p60
      %p62 = scmp.ne.s32.totalorder %s53, %s54
      %p63 = scmp.eq.s32.totalorder %s22, 0
      %p64 = por %p62, %p63
      %p65 = scmp.ne.s32.totalorder %s53, %s54
      %p66 = scmp.eq.s32.totalorder %s23, 1
      %p67 = por %p65, %p66
      %p69 = scmp.ne.s32.totalorder %s54, %s68
      %p70 = scmp.eq.s32.totalorder %s23, 0
      %p71 = por %p69, %p70
      %s73 = sadd.s32 %s72, 1
      %p76 = scmp.eq.s32.totalorder %s17, 1
      %p77 = scmp.ne.s32.totalorder %s72, %s74
      %p78 = scmp.eq.s32.totalorder %s17, 0
      %p79 = por %p77, %p78
      %p80 = scmp.ne.s32.totalorder %s72, %s74
      %p81 = scmp.eq.s32.totalorder %s22, 1
      %p82 = por %p80, %p81
      %p83 = scmp.ne.s32.totalorder %s74, %s75
      %p84 = scmp.eq.s32.totalorder %s22, 0
      %p85 = por %p83, %p84
      %p86 = scmp.ne.s32.totalorder %s74, %s75
      %p87 = scmp.eq.s32.totalorder %s23, 1
      %p88 = por %p86, %p87
      %p90 = scmp.ne.s32.totalorder %s75, %s89
      %p91 = scmp.eq.s32.totalorder %s23, 0
      %p92 = por %p90, %p91
      %s94 = sadd.s32 %s93, 1
      %p97 = scmp.eq.s32.totalorder %s17, 1
      %p98 = scmp.ne.s32.totalorder %s93, %s95
      %p99 = scmp.eq.s32.totalorder %s17, 0
      %p100 = por %p98, %p99
      %p101 = scmp.ne.s32.totalorder %s93, %s95
      %p102 = scmp.eq.s32.totalorder %s22, 1
      %p103 = por %p101, %p102
      %p104 = scmp.ne.s32.totalorder %s95, %s96
      %p105 = scmp.eq.s32.totalorder %s22, 0
      %p106 = por %p104, %p105
      %p107 = scmp.ne.s32.totalorder %s95, %s96
      %p108 = scmp.eq.s32.totalorder %s23, 1
      %p109 = por %p107, %p108
      %p111 = scmp.ne.s32.totalorder %s96, %s110
      %p112 = scmp.eq.s32.totalorder %s23, 0
      %p113 = por %p111, %p112
      %s115 = sadd.s32 %s114, 1
      %p118 = scmp.eq.s32.totalorder %s17, 1
      %p119 = scmp.ne.s32.totalorder %s114, %s116
      %p120 = scmp.eq.s32.totalorder %s17, 0
      %p121 = por %p119, %p120
      %p122 = scmp.ne.s32.totalorder %s114, %s116
      %p123 = scmp.eq.s32.totalorder %s22, 1
      %p124 = por %p122, %p123
      %p125 = scmp.ne.s32.totalorder %s116, %s117
      %p126 = scmp.eq.s32.totalorder %s22, 0
      %p127 = por %p125, %p126
      %p128 = scmp.ne.s32.totalorder %s116, %s117
      %p129 = scmp.eq.s32.totalorder %s23, 1
      %p130 = por %p128, %p129
      %p132 = scmp.ne.s32.totalorder %s117, %s131
      %p133 = scmp.eq.s32.totalorder %s23, 0
      %p134 = por %p132, %p133
      %s136 = sadd.s32 %s135, 1
      %p139 = scmp.eq.s32.totalorder %s17, 1
      %p140 = scmp.ne.s32.totalorder %s135, %s137
      %p141 = scmp.eq.s32.totalorder %s17, 0
      %p142 = por %p140, %p141
      %p143 = scmp.ne.s32.totalorder %s135, %s137
      %p144 = scmp.eq.s32.totalorder %s22, 1
      %p145 = por %p143, %p144
      %p146 = scmp.ne.s32.totalorder %s137, %s138
      %p147 = scmp.eq.s32.totalorder %s22, 0
      %p148 = por %p146, %p147
      %p149 = scmp.ne.s32.totalorder %s137, %s138
      %p150 = scmp.eq.s32.totalorder %s23, 1
      %p151 = por %p149, %p150
      %p153 = scmp.ne.s32.totalorder %s138, %s152
      %p154 = scmp.eq.s32.totalorder %s23, 0
      %p155 = por %p153, %p154
      %s157 = sadd.s32 %s156, 1
      %p160 = scmp.eq.s32.totalorder %s17, 1
      %p161 = scmp.ne.s32.totalorder %s156, %s158
      %p162 = scmp.eq.s32.totalorder %s17, 0
      %p163 = por %p161, %p162
      %p164 = scmp.ne.s32.totalorder %s156, %s158
      %p165 = scmp.eq.s32.totalorder %s22, 1
      %p166 = por %p164, %p165
      %p167 = scmp.ne.s32.totalorder %s158, %s159
      %p168 = scmp.eq.s32.totalorder %s22, 0
      %p169 = por %p167, %p168
      %p170 = scmp.ne.s32.totalorder %s158, %s159
      %p171 = scmp.eq.s32.totalorder %s23, 1
      %p172 = por %p170, %p171
      %p174 = scmp.ne.s32.totalorder %s159, %s173
      %p175 = scmp.eq.s32.totalorder %s23, 0
      %p176 = por %p174, %p175
      %s177 = ssub.s32 %s17, %s24
      %p178 = scmp.eq.s32.totalorder %s177, 0
      %s180 = sadd.s32 %s179, 1
      %s181 = scalar_select %p178, %s179, %s180
      %p184 = pneg %p178
      %p185 = scmp.eq.s32.totalorder %s17, 1
      %p186 = por %p184, %p185
      %p187 = scmp.ne.s32.totalorder %s179, %s182
      %p188 = scmp.eq.s32.totalorder %s17, 0
      %p189 = por %p187, %p188
      %p190 = scmp.ne.s32.totalorder %s179, %s182
      %p191 = scmp.eq.s32.totalorder %s22, 1
      %p192 = por %p190, %p191
      %p193 = scmp.ne.s32.totalorder %s182, %s183
      %p194 = scmp.eq.s32.totalorder %s22, 0
      %p195 = por %p193, %p194
      %p196 = scmp.ne.s32.totalorder %s182, %s183
      %p197 = scmp.eq.s32.totalorder %s23, 1
      %p198 = por %p196, %p197
      %p200 = scmp.ne.s32.totalorder %s183, %s199
      %p201 = scmp.eq.s32.totalorder %s23, 0
      %p202 = por %p200, %p201
      %p203 = scmp.le.s32.totalorder 1, %s17
      %p204 = scmp.lt.s32.totalorder %s17, 3
      %p205 = pnand %p203, %p204
      %p206 = pneg %p205
      // Predicated region
      $region9: #{tpu_custom_call.1} parent=5 // pred_check
        _
      $region10: #{tpu_custom_call.1} parent=5 // pred_check_branch
        %208 = sbr.rel (%p205) target = $region12
      $region11: #{tpu_custom_call.1} parent=5 // pred_region
        %s209 = ssub.s32 %s17, 1
        // Predicated region
        $region13: #{tpu_custom_call.1} parent=11 // pred_check
          %p210 = pneg %p64
        $region14: #{tpu_custom_call.1} parent=11 // pred_check_branch
          %212 = sbr.rel (%p210) target = $region16
        $region15: #{tpu_custom_call.1} parent=11 // pred_region
          _
        $region16: #{tpu_custom_call.1} parent=11 // pred_fallthru
          _
        // Predicated region
        $region17: #{tpu_custom_call.1} parent=11 // pred_check
          %p213 = pneg %p85
        $region18: #{tpu_custom_call.1} parent=11 // pred_check_branch
          %215 = sbr.rel (%p213) target = $region20
        $region19: #{tpu_custom_call.1} parent=11 // pred_region
          _
        $region20: #{tpu_custom_call.1} parent=11 // pred_fallthru
          _
        // Predicated region
        $region21: #{tpu_custom_call.1} parent=11 // pred_check
          %p216 = pneg %p106
        $region22: #{tpu_custom_call.1} parent=11 // pred_check_branch
          %218 = sbr.rel (%p216) target = $region24
        $region23: #{tpu_custom_call.1} parent=11 // pred_region
          %220 = vsyncadd [#allocation3], 0
          %s221 = sshll.u32 %s3, 4
          %s222 = int_to_ptr.hbm [resolvable:$true] %s221
          %s223 = sshll.u32 [#allocation2], 4
          %s224 = int_to_ptr.vmem [resolvable:$true] %s223
          %229 = dma.hbm_to_vmem [thread:$0]  %s222, 3072, %s224, [#allocation3], 64, 64, 4
        $region24: #{tpu_custom_call.1} parent=11 // pred_fallthru
          _
        // Predicated region
        $region25: #{tpu_custom_call.1} parent=11 // pred_check
          %p230 = pneg %p127
        $region26: #{tpu_custom_call.1} parent=11 // pred_check_branch
          %232 = sbr.rel (%p230) target = $region28
        $region27: #{tpu_custom_call.1} parent=11 // pred_region
          _
        $region28: #{tpu_custom_call.1} parent=11 // pred_fallthru
          _
        // Predicated region
        $region29: #{tpu_custom_call.1} parent=11 // pred_check
          %p233 = pneg %p148
        $region30: #{tpu_custom_call.1} parent=11 // pred_check_branch
          %235 = sbr.rel (%p233) target = $region32
        $region31: #{tpu_custom_call.1} parent=11 // pred_region
          _
        $region32: #{tpu_custom_call.1} parent=11 // pred_fallthru
          _
        // Predicated region
        $region33: #{tpu_custom_call.1} parent=11 // pred_check
          %p236 = pneg %p169
        $region34: #{tpu_custom_call.1} parent=11 // pred_check_branch
          %238 = sbr.rel (%p236) target = $region36
        $region35: #{tpu_custom_call.1} parent=11 // pred_region
          _
        $region36: #{tpu_custom_call.1} parent=11 // pred_fallthru
          _
      $region12: #{tpu_custom_call.1} parent=5 // pred_fallthru
        _
      %p239 = scmp.lt.s32.totalorder %s17, 2
      // Predicated region
      $region37: #{tpu_custom_call.1} parent=5 // pred_check
        %p240 = pneg %p239
      $region38: #{tpu_custom_call.1} parent=5 // pred_check_branch
        %242 = sbr.rel (%p240) target = $region40
      $region39: #{tpu_custom_call.1} parent=5 // pred_region
        // Predicated region
        $region41: #{tpu_custom_call.1} parent=39 // pred_check
          %p243 = pneg %p37
        $region42: #{tpu_custom_call.1} parent=39 // pred_check_branch
          %245 = sbr.rel (%p243) target = $region44
        $region43: #{tpu_custom_call.1} parent=39 // pred_region
          %s246 = smul.u32 4, %s17
          %p247 = scmp.lt.s32.totalorder %s246, 7
          %s248 = scalar_select %p247, %s246, 7
          %s249 = smul.addr %s248, 8
          %s250 = scalar_lea.vmem %s0, %s249
          %s251 = smul.u32 4, %s17
        $region44: #{tpu_custom_call.1} parent=39 // pred_fallthru
          _
      $region40: #{tpu_custom_call.1} parent=5 // pred_fallthru
        _
      %p252 = scmp.le.s32.totalorder 1, %s17
      %p253 = scmp.lt.s32.totalorder %s17, 3
      %p254 = pnand %p252, %p253
      %p255 = pneg %p254
      // Predicated region
      $region45: #{tpu_custom_call.1} parent=5 // pred_check
        _
      $region46: #{tpu_custom_call.1} parent=5 // pred_check_branch
        %257 = sbr.rel (%p254) target = $region48
      $region47: #{tpu_custom_call.1} parent=5 // pred_region
        %s258 = ssub.s32 %s17, 1
        // Predicated region
        $region49: #{tpu_custom_call.1} parent=47 // pred_check
          %p259 = pneg %p106
        $region50: #{tpu_custom_call.1} parent=47 // pred_check_branch
          %261 = sbr.rel (%p259) target = $region52
        $region51: #{tpu_custom_call.1} parent=47 // pred_region
          %263 = dma.done [#allocation3], 3072
        $region52: #{tpu_custom_call.1} parent=47 // pred_fallthru
          _
        %s264 = smul.u32 4, %s22
        %p265 = scmp.lt.s32.totalorder %s264, 7
        %s266 = scalar_select %p265, %s264, 7
        %s267 = smul.addr %s266, 8
        %s268 = scalar_lea.vmem %s0, %s267
        %p269 = pneg %p43
        %p270 = pneg %p40
        %p271 = pneg %p64
        %p272 = pneg %p61
        %p273 = pneg %p85
        %p274 = pneg %p82
        %p275 = pneg %p106
        %p276 = pneg %p103
        %p277 = pneg %p127
        %p278 = pneg %p124
        %p279 = pneg %p148
        %p280 = pneg %p145
        %p281 = pneg %p169
        %p282 = pneg %p166
        %p283 = pneg %p195
        %p284 = pneg %p192
        %s285 = sand.u32 %s182, 1
        %s286 = scalar_lea.sflag [#allocation4], %s285
        %s287 = sand.u32 %s182, 1
        %s288 = smul.addr %s287, 32
        %s289 = scalar_lea.vmem [#allocation5], %s288
        %s290 = smul.u32 4, %s22
        %p291 = scmp.lt.s32.totalorder %s290, 7
        %s292 = scalar_select %p291, %s290, 7
        %s293 = smul.addr %s292, 8
        %s294 = scalar_lea.vmem %s0, %s293
        %s295 = smul.u32 4, %s22
        %s296 = smul.u32 4, %s22
        %v298 = vld [vmem:[%s294] sm:$0xff]
        %v299 = vld [vmem:[%s294 + $0x8] sm:$0xff]
        %v300 = vld [vmem:[%s294 + $0x10] sm:$0xff]
        %v301 = vld [vmem:[%s294 + $0x18] sm:$0xff]
        %v302 = vpack.c.bf16 %v299, %v298
        %v303 = vpack.c.bf16 %v301, %v300
        %v304 = vld [vmem:[%s1] sm:$0xf]
        %v305 = vld [vmem:[%s1 + $0x4] sm:$0xf]
        %v306 = vld [vmem:[%s1 + $0x8] sm:$0xf]
        %v307 = vld [vmem:[%s1 + $0xc] sm:$0xf]
        %v308 = vld [vmem:[%s2] sm:$0x1]
        %v310 = vperm.slane %v308, 0
        %v316 = vunpack.c.l.b16 %v304
        %v317 = vunpack.c.l.b16 %v305
        %v318 = vunpack.c.l.b16 %v306
        %v319 = vunpack.c.l.b16 %v307
        %v320 = vpack.c.b16 %v317, %v316
        %v321 = vpack.c.b16 %v319, %v318
        %vm324 = vcmask 261120
        %v326 = vsel %vm324, %v302, 0
        %v329 = vsel %vm324, %v303, 0
        %331 = vmatpush.bf16.msra.mxu0 0
        %332 = vmatpush.bf16.msra.mxu0 0
        %333 = vmatpush.bf16.msra.mxu0 0
        %334 = vmatpush.bf16.msra.mxu0 0
        %335 = vmatpush.bf16.msra.mxu0 0
        %336 = vmatpush.bf16.msra.mxu0 0
        %337 = vmatpush.bf16.msra.mxu0 %v321
        %338 = vmatpush.bf16.msra.mxu0 %v320
        %339 = vmatmul.bf16.gmra.mxu0 %v326
        %v340 = vpop.f32.mrf.mxu0
        %v341 = vadd.f32 %v310, %v340
        %v342 = vpop.f32.mrf.mxu0
        %v343 = vadd.f32 %v310, %v342
        %344 = vmatmul.bf16.gmra.mxu0 %v329
        %v345 = vpop.f32.mrf.mxu0
        %v346 = vadd.f32 %v310, %v345
        %v347 = vpop.f32.mrf.mxu0
        %v348 = vadd.f32 %v310, %v347
        %349 = vdwg.mxu0
        %v350 = vmax.f32 %v341, 0.0
        %v351 = vmax.f32 %v343, 0.0
        %v352 = vmax.f32 %v346, 0.0
        %v353 = vmax.f32 %v348, 0.0
        %v354 = vpack.c.bf16 %v351, %v350
        %v355 = vpack.c.bf16 %v353, %v352
        %v356 = vld [vmem:[#allocation2] sm:$0xf]
        %v357 = vld [vmem:[#allocation2 + $0x4] sm:$0xf]
        %v358 = vld [vmem:[#allocation2 + $0x8] sm:$0xf]
        %v359 = vld [vmem:[#allocation2 + $0xc] sm:$0xf]
        %v360 = vld [vmem:[#allocation2 + $0x10] sm:$0xf]
        %v361 = vld [vmem:[#allocation2 + $0x14] sm:$0xf]
        %v362 = vld [vmem:[#allocation2 + $0x18] sm:$0xf]
        %v363 = vld [vmem:[#allocation2 + $0x1c] sm:$0xf]
        %v364 = vld [vmem:[#allocation2 + $0x20] sm:$0xf]
        %v365 = vld [vmem:[#allocation2 + $0x24] sm:$0xf]
        %v366 = vld [vmem:[#allocation2 + $0x28] sm:$0xf]
        %v367 = vld [vmem:[#allocation2 + $0x2c] sm:$0xf]
        %v368 = vld [vmem:[#allocation2 + $0x30] sm:$0xf]
        %v369 = vld [vmem:[#allocation2 + $0x34] sm:$0xf]
        %v370 = vld [vmem:[#allocation2 + $0x38] sm:$0xf]
        %v371 = vld [vmem:[#allocation2 + $0x3c] sm:$0xf]
        %v372 = vld [vmem:[%s4] sm:$0x1]
        %v374 = vperm.slane %v372, 0
        %v392 = vunpack.c.l.b16 %v356
        %v393 = vunpack.c.l.b16 %v357
        %v394 = vunpack.c.l.b16 %v358
        %v395 = vunpack.c.l.b16 %v359
        %v396 = vunpack.c.l.b16 %v360
        %v397 = vunpack.c.l.b16 %v361
        %v398 = vunpack.c.l.b16 %v362
        %v399 = vunpack.c.l.b16 %v363
        %v400 = vunpack.c.l.b16 %v364
        %v401 = vunpack.c.l.b16 %v365
        %v402 = vunpack.c.l.b16 %v366
        %v403 = vunpack.c.l.b16 %v367
        %v404 = vunpack.c.l.b16 %v368
        %v405 = vunpack.c.l.b16 %v369
        %v406 = vunpack.c.l.b16 %v370
        %v407 = vunpack.c.l.b16 %v371
        %v408 = vpack.c.b16 %v393, %v392
        %v409 = vpack.c.b16 %v395, %v394
        %v410 = vpack.c.b16 %v397, %v396
        %v411 = vpack.c.b16 %v399, %v398
        %v412 = vpack.c.b16 %v401, %v400
        %v413 = vpack.c.b16 %v403, %v402
        %v414 = vpack.c.b16 %v405, %v404
        %v415 = vpack.c.b16 %v407, %v406
        %424 = vmatpush.bf16.msra.mxu0 %v415
        %425 = vmatpush.bf16.msra.mxu0 %v414
        %426 = vmatpush.bf16.msra.mxu0 %v413
        %427 = vmatpush.bf16.msra.mxu0 %v412
        %428 = vmatpush.bf16.msra.mxu0 %v411
        %429 = vmatpush.bf16.msra.mxu0 %v410
        %430 = vmatpush.bf16.msra.mxu0 %v409
        %431 = vmatpush.bf16.msra.mxu0 %v408
        %432 = vmatmul.bf16.gmra.mxu0 %v354
        %v433 = vpop.f32.mrf.mxu0
        %v434 = vadd.f32 %v374, %v433
        %v435 = vpop.f32.mrf.mxu0
        %v436 = vadd.f32 %v374, %v435
        %437 = vmatmul.bf16.gmra.mxu0 %v355
        %v438 = vpop.f32.mrf.mxu0
        %v439 = vadd.f32 %v374, %v438
        %v440 = vpop.f32.mrf.mxu0
        %v441 = vadd.f32 %v374, %v440
        %442 = vdwg.mxu0
        %v443 = vmax.f32 %v434, 0.0
        %v444 = vmax.f32 %v436, 0.0
        %v445 = vmax.f32 %v439, 0.0
        %v446 = vmax.f32 %v441, 0.0
        %v447 = vpack.c.bf16 %v444, %v443
        %v448 = vpack.c.bf16 %v446, %v445
        %s449 = scalar_lea.vmem [#allocation2], 64
        %v450 = vld [vmem:[%s449] sm:$0xf]
        %v451 = vld [vmem:[%s449 + $0x4] sm:$0xf]
        %v452 = vld [vmem:[%s449 + $0x8] sm:$0xf]
        %v453 = vld [vmem:[%s449 + $0xc] sm:$0xf]
        %v454 = vld [vmem:[%s449 + $0x10] sm:$0xf]
        %v455 = vld [vmem:[%s449 + $0x14] sm:$0xf]
        %v456 = vld [vmem:[%s449 + $0x18] sm:$0xf]
        %v457 = vld [vmem:[%s449 + $0x1c] sm:$0xf]
        %v458 = vld [vmem:[%s449 + $0x20] sm:$0xf]
        %v459 = vld [vmem:[%s449 + $0x24] sm:$0xf]
        %v460 = vld [vmem:[%s449 + $0x28] sm:$0xf]
        %v461 = vld [vmem:[%s449 + $0x2c] sm:$0xf]
        %v462 = vld [vmem:[%s449 + $0x30] sm:$0xf]
        %v463 = vld [vmem:[%s449 + $0x34] sm:$0xf]
        %v464 = vld [vmem:[%s449 + $0x38] sm:$0xf]
        %v465 = vld [vmem:[%s449 + $0x3c] sm:$0xf]
        %s466 = scalar_lea.vmem %s4, 1
        %v467 = vld [vmem:[%s466] sm:$0x1]
        %v469 = vperm.slane %v467, 0
        %v487 = vunpack.c.l.b16 %v450
        %v488 = vunpack.c.l.b16 %v451
        %v489 = vunpack.c.l.b16 %v452
        %v490 = vunpack.c.l.b16 %v453
        %v491 = vunpack.c.l.b16 %v454
        %v492 = vunpack.c.l.b16 %v455
        %v493 = vunpack.c.l.b16 %v456
        %v494 = vunpack.c.l.b16 %v457
        %v495 = vunpack.c.l.b16 %v458
        %v496 = vunpack.c.l.b16 %v459
        %v497 = vunpack.c.l.b16 %v460
        %v498 = vunpack.c.l.b16 %v461
        %v499 = vunpack.c.l.b16 %v462
        %v500 = vunpack.c.l.b16 %v463
        %v501 = vunpack.c.l.b16 %v464
        %v502 = vunpack.c.l.b16 %v465
        %v503 = vpack.c.b16 %v488, %v487
        %v504 = vpack.c.b16 %v490, %v489
        %v505 = vpack.c.b16 %v492, %v491
        %v506 = vpack.c.b16 %v494, %v493
        %v507 = vpack.c.b16 %v496, %v495
        %v508 = vpack.c.b16 %v498, %v497
        %v509 = vpack.c.b16 %v500, %v499
        %v510 = vpack.c.b16 %v502, %v501
        %519 = vmatpush.bf16.msra.mxu0 %v510
        %520 = vmatpush.bf16.msra.mxu0 %v509
        %521 = vmatpush.bf16.msra.mxu0 %v508
        %522 = vmatpush.bf16.msra.mxu0 %v507
        %523 = vmatpush.bf16.msra.mxu0 %v506
        %524 = vmatpush.bf16.msra.mxu0 %v505
        %525 = vmatpush.bf16.msra.mxu0 %v504
        %526 = vmatpush.bf16.msra.mxu0 %v503
        %527 = vmatmul.bf16.gmra.mxu0 %v447
        %v528 = vpop.f32.mrf.mxu0
        %v529 = vadd.f32 %v469, %v528
        %v530 = vpop.f32.mrf.mxu0
        %v531 = vadd.f32 %v469, %v530
        %532 = vmatmul.bf16.gmra.mxu0 %v448
        %v533 = vpop.f32.mrf.mxu0
        %v534 = vadd.f32 %v469, %v533
        %v535 = vpop.f32.mrf.mxu0
        %v536 = vadd.f32 %v469, %v535
        %537 = vdwg.mxu0
        %v538 = vmax.f32 %v529, 0.0
        %v539 = vmax.f32 %v531, 0.0
        %v540 = vmax.f32 %v534, 0.0
        %v541 = vmax.f32 %v536, 0.0
        %v542 = vpack.c.bf16 %v539, %v538
        %v543 = vpack.c.bf16 %v541, %v540
        %s544 = scalar_lea.vmem [#allocation2], 128
        %v545 = vld [vmem:[%s544] sm:$0xf]
        %v546 = vld [vmem:[%s544 + $0x4] sm:$0xf]
        %v547 = vld [vmem:[%s544 + $0x8] sm:$0xf]
        %v548 = vld [vmem:[%s544 + $0xc] sm:$0xf]
        %v549 = vld [vmem:[%s544 + $0x10] sm:$0xf]
        %v550 = vld [vmem:[%s544 + $0x14] sm:$0xf]
        %v551 = vld [vmem:[%s544 + $0x18] sm:$0xf]
        %v552 = vld [vmem:[%s544 + $0x1c] sm:$0xf]
        %v553 = vld [vmem:[%s544 + $0x20] sm:$0xf]
        %v554 = vld [vmem:[%s544 + $0x24] sm:$0xf]
        %v555 = vld [vmem:[%s544 + $0x28] sm:$0xf]
        %v556 = vld [vmem:[%s544 + $0x2c] sm:$0xf]
        %v557 = vld [vmem:[%s544 + $0x30] sm:$0xf]
        %v558 = vld [vmem:[%s544 + $0x34] sm:$0xf]
        %v559 = vld [vmem:[%s544 + $0x38] sm:$0xf]
        %v560 = vld [vmem:[%s544 + $0x3c] sm:$0xf]
        %s561 = scalar_lea.vmem %s4, 2
        %v562 = vld [vmem:[%s561] sm:$0x1]
        %v564 = vperm.slane %v562, 0
        %v582 = vunpack.c.l.b16 %v545
        %v583 = vunpack.c.l.b16 %v546
        %v584 = vunpack.c.l.b16 %v547
        %v585 = vunpack.c.l.b16 %v548
        %v586 = vunpack.c.l.b16 %v549
        %v587 = vunpack.c.l.b16 %v550
        %v588 = vunpack.c.l.b16 %v551
        %v589 = vunpack.c.l.b16 %v552
        %v590 = vunpack.c.l.b16 %v553
        %v591 = vunpack.c.l.b16 %v554
        %v592 = vunpack.c.l.b16 %v555
        %v593 = vunpack.c.l.b16 %v556
        %v594 = vunpack.c.l.b16 %v557
        %v595 = vunpack.c.l.b16 %v558
        %v596 = vunpack.c.l.b16 %v559
        %v597 = vunpack.c.l.b16 %v560
        %v598 = vpack.c.b16 %v583, %v582
        %v599 = vpack.c.b16 %v585, %v584
        %v600 = vpack.c.b16 %v587, %v586
        %v601 = vpack.c.b16 %v589, %v588
        %v602 = vpack.c.b16 %v591, %v590
        %v603 = vpack.c.b16 %v593, %v592
        %v604 = vpack.c.b16 %v595, %v594
        %v605 = vpack.c.b16 %v597, %v596
        %614 = vmatpush.bf16.msra.mxu0 %v605
        %615 = vmatpush.bf16.msra.mxu0 %v604
        %616 = vmatpush.bf16.msra.mxu0 %v603
        %617 = vmatpush.bf16.msra.mxu0 %v602
        %618 = vmatpush.bf16.msra.mxu0 %v601
        %619 = vmatpush.bf16.msra.mxu0 %v600
        %620 = vmatpush.bf16.msra.mxu0 %v599
        %621 = vmatpush.bf16.msra.mxu0 %v598
        %622 = vmatmul.bf16.gmra.mxu0 %v542
        %v623 = vpop.f32.mrf.mxu0
        %v624 = vadd.f32 %v564, %v623
        %v625 = vpop.f32.mrf.mxu0
        %v626 = vadd.f32 %v564, %v625
        %627 = vmatmul.bf16.gmra.mxu0 %v543
        %v628 = vpop.f32.mrf.mxu0
        %v629 = vadd.f32 %v564, %v628
        %v630 = vpop.f32.mrf.mxu0
        %v631 = vadd.f32 %v564, %v630
        %632 = vdwg.mxu0
        %v633 = vmax.f32 %v624, 0.0
        %v634 = vmax.f32 %v626, 0.0
        %v635 = vmax.f32 %v629, 0.0
        %v636 = vmax.f32 %v631, 0.0
        %v637 = vpack.c.bf16 %v634, %v633
        %v638 = vpack.c.bf16 %v636, %v635
        %v639 = vld [vmem:[%s5] sm:$0xf]
        %v640 = vld [vmem:[%s5 + $0x4] sm:$0xf]
        %v641 = vld [vmem:[%s5 + $0x8] sm:$0xf]
        %v642 = vld [vmem:[%s5 + $0xc] sm:$0xf]
        %v643 = vld [vmem:[%s5 + $0x10] sm:$0xf]
        %v644 = vld [vmem:[%s5 + $0x14] sm:$0xf]
        %v645 = vld [vmem:[%s5 + $0x18] sm:$0xf]
        %v646 = vld [vmem:[%s5 + $0x1c] sm:$0xf]
        %v647 = vld [vmem:[%s5 + $0x20] sm:$0xf]
        %v648 = vld [vmem:[%s5 + $0x24] sm:$0xf]
        %v649 = vld [vmem:[%s5 + $0x28] sm:$0xf]
        %v650 = vld [vmem:[%s5 + $0x2c] sm:$0xf]
        %v651 = vld [vmem:[%s5 + $0x30] sm:$0xf]
        %v652 = vld [vmem:[%s5 + $0x34] sm:$0xf]
        %v653 = vld [vmem:[%s5 + $0x38] sm:$0xf]
        %v654 = vld [vmem:[%s5 + $0x3c] sm:$0xf]
        %v655 = vld [vmem:[%s6] sm:$0x1]
        %v657 = vperm.slane %v655, 0
        %v675 = vunpack.c.l.b16 %v639
        %v676 = vunpack.c.l.b16 %v640
        %v677 = vunpack.c.l.b16 %v641
        %v678 = vunpack.c.l.b16 %v642
        %v679 = vunpack.c.l.b16 %v643
        %v680 = vunpack.c.l.b16 %v644
        %v681 = vunpack.c.l.b16 %v645
        %v682 = vunpack.c.l.b16 %v646
        %v683 = vunpack.c.l.b16 %v647
        %v684 = vunpack.c.l.b16 %v648
        %v685 = vunpack.c.l.b16 %v649
        %v686 = vunpack.c.l.b16 %v650
        %v687 = vunpack.c.l.b16 %v651
        %v688 = vunpack.c.l.b16 %v652
        %v689 = vunpack.c.l.b16 %v653
        %v690 = vunpack.c.l.b16 %v654
        %v691 = vpack.c.b16 %v676, %v675
        %v692 = vpack.c.b16 %v678, %v677
        %v693 = vpack.c.b16 %v680, %v679
        %v694 = vpack.c.b16 %v682, %v681
        %v695 = vpack.c.b16 %v684, %v683
        %v696 = vpack.c.b16 %v686, %v685
        %v697 = vpack.c.b16 %v688, %v687
        %v698 = vpack.c.b16 %v690, %v689
        %707 = vmatpush.bf16.msra.mxu0 %v698
        %708 = vmatpush.bf16.msra.mxu0 %v697
        %709 = vmatpush.bf16.msra.mxu0 %v696
        %710 = vmatpush.bf16.msra.mxu0 %v695
        %711 = vmatpush.bf16.msra.mxu0 %v694
        %712 = vmatpush.bf16.msra.mxu0 %v693
        %713 = vmatpush.bf16.msra.mxu0 %v692
        %714 = vmatpush.bf16.msra.mxu0 %v691
        %715 = vmatmul.bf16.gmra.mxu0 %v637
        %v716 = vpop.f32.mrf.mxu0
        %v717 = vadd.f32 %v657, %v716
        %v718 = vpop.f32.mrf.mxu0
        %v719 = vadd.f32 %v657, %v718
        %720 = vmatmul.bf16.gmra.mxu0 %v638
        %v721 = vpop.f32.mrf.mxu0
        %v722 = vadd.f32 %v657, %v721
        %v723 = vpop.f32.mrf.mxu0
        %v724 = vadd.f32 %v657, %v723
        %725 = vdwg.mxu0
        %726 = vst [vmem:[%s289] sm:$0xff] %v717
        %727 = vst [vmem:[%s289 + $0x8] sm:$0xff] %v719
        %728 = vst [vmem:[%s289 + $0x10] sm:$0xff] %v722
        %729 = vst [vmem:[%s289 + $0x18] sm:$0xff] %v724
        %s730 = sand.u32 %s182, 1
        %s731 = scalar_lea.sflag [#allocation4], %s730
        %s732 = sand.u32 %s182, 1
        %s733 = smul.addr %s732, 32
        %s734 = scalar_lea.vmem [#allocation5], %s733
        // Predicated region
        $region53: #{tpu_custom_call.1} parent=47 // pred_check
          %p735 = pneg %p192
        $region54: #{tpu_custom_call.1} parent=47 // pred_check_branch
          %737 = sbr.rel (%p735) target = $region56
        $region55: #{tpu_custom_call.1} parent=47 // pred_region
          %s738 = smul.u32 4, %s22
          %740 = vsyncadd %s731, 0
          %s741 = smul.addr %s738, 8
          %s742 = scalar_lea.hbm %s7, %s741
          %s743 = sshll.u32 %s734, 4
          %s744 = int_to_ptr.vmem [resolvable:$true] %s743
          %s745 = sshll.u32 %s742, 4
          %s746 = int_to_ptr.hbm [resolvable:$true] %s745
          %751 = dma.vmem_to_hbm [thread:$0]  %s744, 512, %s746, %s731, 128, 128, 8
        $region56: #{tpu_custom_call.1} parent=47 // pred_fallthru
          _
      $region48: #{tpu_custom_call.1} parent=5 // pred_fallthru
        _
      %p752 = scmp.le.s32.totalorder 2, %s17
      // Predicated region
      $region57: #{tpu_custom_call.1} parent=5 // pred_check
        %p753 = pneg %p752
      $region58: #{tpu_custom_call.1} parent=5 // pred_check_branch
        %755 = sbr.rel (%p753) target = $region60
      $region59: #{tpu_custom_call.1} parent=5 // pred_region
        %s756 = ssub.s32 %s17, 2
        // Predicated region
        $region61: #{tpu_custom_call.1} parent=59 // pred_check
          %p757 = pneg %p198
        $region62: #{tpu_custom_call.1} parent=59 // pred_check_branch
          %759 = sbr.rel (%p757) target = $region64
        $region63: #{tpu_custom_call.1} parent=59 // pred_region
          %s760 = sand.u32 %s183, 1
          %s761 = scalar_lea.sflag [#allocation4], %s760
          %s762 = sand.u32 %s183, 1
          %s763 = smul.addr %s762, 32
          %s764 = scalar_lea.vmem [#allocation5], %s763
          %766 = dma.done %s761, 512
        $region64: #{tpu_custom_call.1} parent=59 // pred_fallthru
          _
      $region60: #{tpu_custom_call.1} parent=5 // pred_fallthru
        _
    $region6: #{tpu_custom_call.1} parent=1 // loop_footer
      %s21 = sadd.s32 1, %s17
    $region7: #{tpu_custom_call.1} parent=1 // loop_footer_branch
      %16 = sbr.rel target = $region3
    $region8: #{tpu_custom_call.1} parent=1 // loop_exit
      _
    %767 = vsyncpa [#allocation3], 1
    %s768 = scalar_lea.sflag [#allocation3], 1
    %769 = vsyncpa %s768, 1
    %770 = vsyncpa [#allocation4], 1
    %s771 = scalar_lea.sflag [#allocation4], 1
    %772 = vsyncpa %s771, 1

</llo_original>
